<compile_context>
chip_gen: v6e
topology: v6e:2x2x1
jax: 0.10.0
libtpu: 0.0.40
codegen_flags: <defaults>
</compile_context>

<pallas_src>
import functools

import jax
import jax.numpy as jnp
from jax.experimental import pallas as pl
from jax.experimental.pallas import tpu as pltpu


def _round_up(x, m):
    return ((x + m - 1) // m) * m


def _base_model_kernel(ids_ref, attn_ref, table_ref, drop_ref, w_ref, b_ref,
                       out_ref, *, seq_len):
    # ids_ref   : [BSp, 1]  int32   (flattened, padded token ids)
    # attn_ref  : [1, BSp]  float32 (flattened, padded attention mask)
    # table_ref : [Vp, Hp]  bfloat16 (zero-padded embedding table)
    # drop_ref  : [B, Hp]   float32 (DropoutWords mask, already 1/(1-p) scaled)
    # w_ref     : [Hp, Lp]  float32 ; b_ref : [1, Lp] float32
    # out_ref   : [B, Lp]   float32
    BSp = ids_ref.shape[0]
    Vp = table_ref.shape[0]
    B = out_ref.shape[0]

    # ---- one-hot over the padded vocab (bf16 MXU operand) ----
    iota_v = jax.lax.broadcasted_iota(jnp.int32, (BSp, Vp), 1)
    onehot = (ids_ref[...] == iota_v).astype(jnp.bfloat16)            # [BSp,Vp]

    # ---- attention-weighted segment-pooling matrix P[b, j] ----
    # P[b, b*S + s] = attn[b, s]; zero elsewhere (and on padded rows).
    j_idx = jax.lax.broadcasted_iota(jnp.int32, (B, BSp), 1)
    b_idx = jax.lax.broadcasted_iota(jnp.int32, (B, BSp), 0)
    lo = b_idx * seq_len
    seg = jnp.logical_and(j_idx >= lo, j_idx < lo + seq_len)
    pw_f32 = seg.astype(jnp.float32) * attn_ref[...]                  # [B,BSp]
    denom = jnp.sum(pw_f32, axis=1, keepdims=True)                    # [B,1]
    pw = pw_f32.astype(jnp.bfloat16)

    # ---- weighted bag-of-words: bag[b,v] = sum_s attn[b,s]*(ids[b,s]==v) ----
    bag = jnp.dot(pw, onehot, preferred_element_type=jnp.float32)     # [B,Vp]

    # ---- pooled (unnormalized) embeddings: bag @ table  (B x V x H MXU) ----
    pooled = jnp.dot(bag.astype(jnp.bfloat16), table_ref[...],
                     preferred_element_type=jnp.float32)              # [B,Hp]

    # ---- mean-pool normalization (EUP reciprocal) + DropoutWords post-pool --
    inv = pl.reciprocal(jnp.maximum(denom, 1.0), approx=True)         # [B,1]
    pooled = pooled * inv * drop_ref[...]                             # [B,Hp]

    # ---- stand-in classification head ----
    logits = jnp.dot(pooled, w_ref[...],
                     preferred_element_type=jnp.float32) + b_ref[...]  # [B,Lp]
    out_ref[...] = logits


def init_params(key, vocab_size=64, hidden=32, num_labels=3,
                dropout_rate=0.1):
    k_emb, k_w = jax.random.split(key)
    return {
        "embedding": jax.random.normal(k_emb, (vocab_size, hidden),
                                       jnp.float32) * 0.02,
        "classifier_w": jax.random.normal(k_w, (hidden, num_labels),
                                          jnp.float32) * 0.02,
        "classifier_b": jnp.zeros((1, num_labels), jnp.float32),
        "dropout_rate": dropout_rate,
    }


def base_model_forward(params, input_ids, attention_mask=None,
                       use_dropout=False, dropout_key=None):
    B, S = input_ids.shape
    V, H = params["embedding"].shape
    L = params["classifier_w"].shape[1]

    LANE, SUB = 128, 8
    Vp, Hp, Lp = _round_up(V, LANE), _round_up(H, LANE), _round_up(L, LANE)
    BS = B * S
    BSp = _round_up(BS, SUB)

    # ---- flattened, padded token ids / attention mask ----
    if attention_mask is None:
        attention_mask = jnp.ones((B, S), jnp.float32)
    attn_flat = attention_mask.astype(jnp.float32).reshape(1, BS)
    attn_flat = jnp.pad(attn_flat, ((0, 0), (0, BSp - BS)))
    ids_flat = input_ids.astype(jnp.int32).reshape(BS, 1)
    ids_flat = jnp.pad(ids_flat, ((0, BSp - BS), (0, 0)))

    # ---- lane-padded, bf16 embedding table; f32 classifier head ----
    table = jnp.pad(params["embedding"], ((0, Vp - V), (0, Hp - H)))
    table = table.astype(jnp.bfloat16)
    w = jnp.pad(params["classifier_w"].astype(jnp.float32),
                ((0, Hp - H), (0, Lp - L)))
    b = jnp.pad(params["classifier_b"].astype(jnp.float32).reshape(1, L),
                ((0, 0), (0, Lp - L)))

    # ---- DropoutWords mask: per-(batch, hidden-dim), scaled by 1/(1-p) ----
    # TODO(synk): could be generated in-kernel via pltpu.prng_seed +
    # prng_random_bits; kept host-side here (tiny [B,H] tensor).
    p = float(params["dropout_rate"])
    if use_dropout and p > 0.0:
        assert dropout_key is not None
        keep = jax.random.bernoulli(dropout_key, 1.0 - p, (B, H))
        drop_mask = keep.astype(jnp.float32) / (1.0 - p)
    else:
        drop_mask = jnp.ones((B, H), jnp.float32)
    drop_mask = jnp.pad(drop_mask, ((0, 0), (0, Hp - H)), constant_values=1.0)

    vmem = pl.BlockSpec(memory_space=pltpu.MemorySpace.VMEM)
    kernel = functools.partial(_base_model_kernel, seq_len=S)
    logits_padded = pl.pallas_call(
        kernel,
        out_shape=jax.ShapeDtypeStruct((B, Lp), jnp.float32),
        in_specs=[vmem] * 6,
        out_specs=vmem,
        compiler_params=pltpu.CompilerParams(
            vmem_limit_bytes=32 * 1024 * 1024),
    )(ids_flat, attn_flat, table, drop_mask, w, b)
    return logits_padded[:, :L]


if __name__ == "__main__":
    key = jax.random.PRNGKey(0)
    k_params, k_ids, k_drop = jax.random.split(key, 3)

    B, S, V, H, L = 2, 8, 64, 32, 3
    params = init_params(k_params, vocab_size=V, hidden=H, num_labels=L,
                         dropout_rate=0.1)

    input_ids = jax.random.randint(k_ids, (B, S), 0, V, jnp.int32)
    attention_mask = jnp.ones((B, S), jnp.float32)

    # eval-style call (use_dropout=False) and train-style call (use_dropout=True)
    logits_eval = base_model_forward(params, input_ids, attention_mask,
                                     use_dropout=False)
    logits_train = base_model_forward(params, input_ids, attention_mask,
                                      use_dropout=True, dropout_key=k_drop)
    jax.block_until_ready((logits_eval, logits_train))

    assert logits_eval.shape == (B, L) and logits_train.shape == (B, L)
    assert bool(jnp.all(jnp.isfinite(logits_eval)))
    assert bool(jnp.all(jnp.isfinite(logits_train)))
    print("KERNEL_OK")
</pallas_src>

<mosaic_0001>
module attributes {stable_mosaic.version = 11 : i64} {
  func.func @_base_model_kernel(%arg0: memref<16x1xi32, #tpu.memory_space<vmem>>, %arg1: memref<1x16xf32, #tpu.memory_space<vmem>>, %arg2: memref<128x128xbf16, #tpu.memory_space<vmem>>, %arg3: memref<2x128xf32, #tpu.memory_space<vmem>>, %arg4: memref<128x128xf32, #tpu.memory_space<vmem>>, %arg5: memref<1x128xf32, #tpu.memory_space<vmem>>, %arg6: memref<2x128xf32, #tpu.memory_space<vmem>>) attributes {dimension_semantics = [], scalar_prefetch = 0 : i64, scratch_operands = 0 : i64, tpu.core_type = #tpu.core_type<tc>} {
    %0 = tpu.iota {dimensions = array<i32: 1>} : vector<16x128xi32>
    %c0 = arith.constant 0 : index
    %c0_0 = arith.constant 0 : index
    %1 = vector.load %arg0[%c0, %c0_0] : memref<16x1xi32, #tpu.memory_space<vmem>>, vector<16x1xi32>
    %2 = vector.broadcast %1 : vector<16x1xi32> to vector<16x128xi32>
    %3 = arith.cmpi eq, %2, %0 : vector<16x128xi32>
    %4 = arith.extui %3 : vector<16x128xi1> to vector<16x128xi32>
    %5 = arith.sitofp %4 : vector<16x128xi32> to vector<16x128xf32>
    %6 = arith.truncf %5 : vector<16x128xf32> to vector<16x128xbf16>
    %7 = tpu.iota {dimensions = array<i32: 1>} : vector<2x16xi32>
    %8 = tpu.iota {dimensions = array<i32: 0>} : vector<2x16xi32>
    %c8_i32 = arith.constant 8 : i32
    %9 = vector.broadcast %c8_i32 : i32 to vector<2x16xi32>
    %10 = arith.muli %8, %9 : vector<2x16xi32>
    %11 = arith.cmpi sge, %7, %10 : vector<2x16xi32>
    %c8_i32_1 = arith.constant 8 : i32
    %12 = vector.broadcast %c8_i32_1 : i32 to vector<2x16xi32>
    %13 = arith.addi %10, %12 : vector<2x16xi32>
    %14 = arith.cmpi slt, %7, %13 : vector<2x16xi32>
    %15 = arith.andi %11, %14 : vector<2x16xi1>
    %16 = arith.extui %15 : vector<2x16xi1> to vector<2x16xi32>
    %17 = arith.sitofp %16 : vector<2x16xi32> to vector<2x16xf32>
    %c0_2 = arith.constant 0 : index
    %c0_3 = arith.constant 0 : index
    %18 = vector.load %arg1[%c0_2, %c0_3] : memref<1x16xf32, #tpu.memory_space<vmem>>, vector<1x16xf32>
    %19 = vector.broadcast %18 : vector<1x16xf32> to vector<2x16xf32>
    %20 = arith.mulf %17, %19 : vector<2x16xf32>
    %cst = arith.constant dense<0.000000e+00> : vector<2xf32>
    %21 = vector.multi_reduction <add>, %20, %cst [1] : vector<2x16xf32> to vector<2xf32>
    %22 = vector.shape_cast %21 : vector<2xf32> to vector<2x1xf32>
    %23 = arith.truncf %20 : vector<2x16xf32> to vector<2x16xbf16>
    %cst_4 = arith.constant dense<0.000000e+00> : vector<2x128xf32>
    %24 = tpu.matmul %23, %6, %cst_4 {dimension_numbers = #tpu.dot_dimension_numbers<[1], [0], [0], [1], [0, 0, 1, 1], [], []>} : vector<2x16xbf16>, vector<16x128xbf16>, vector<2x128xf32> -> vector<2x128xf32>
    %25 = arith.truncf %24 : vector<2x128xf32> to vector<2x128xbf16>
    %c0_5 = arith.constant 0 : index
    %c0_6 = arith.constant 0 : index
    %26 = vector.load %arg2[%c0_5, %c0_6] : memref<128x128xbf16, #tpu.memory_space<vmem>>, vector<128x128xbf16>
    %cst_7 = arith.constant dense<0.000000e+00> : vector<2x128xf32>
    %27 = tpu.matmul %25, %26, %cst_7 {dimension_numbers = #tpu.dot_dimension_numbers<[1], [0], [0], [1], [0, 0, 1, 1], [], []>} : vector<2x128xbf16>, vector<128x128xbf16>, vector<2x128xf32> -> vector<2x128xf32>
    %cst_8 = arith.constant 1.000000e+00 : f32
    %28 = vector.broadcast %cst_8 : f32 to vector<2x1xf32>
    %29 = arith.maximumf %22, %28 : vector<2x1xf32>
    %30 = tpu.reciprocal %29 {approx = true} : vector<2x1xf32> -> vector<2x1xf32>
    %31 = vector.broadcast %30 : vector<2x1xf32> to vector<2x128xf32>
    %32 = arith.mulf %27, %31 : vector<2x128xf32>
    %c0_9 = arith.constant 0 : index
    %c0_10 = arith.constant 0 : index
    %33 = vector.load %arg3[%c0_9, %c0_10] : memref<2x128xf32, #tpu.memory_space<vmem>>, vector<2x128xf32>
    %34 = arith.mulf %32, %33 : vector<2x128xf32>
    %c0_11 = arith.constant 0 : index
    %c0_12 = arith.constant 0 : index
    %35 = vector.load %arg4[%c0_11, %c0_12] : memref<128x128xf32, #tpu.memory_space<vmem>>, vector<128x128xf32>
    %cst_13 = arith.constant dense<0.000000e+00> : vector<2x128xf32>
    %36 = tpu.matmul %34, %35, %cst_13 {dimension_numbers = #tpu.dot_dimension_numbers<[1], [0], [0], [1], [0, 0, 1, 1], [], []>} : vector<2x128xf32>, vector<128x128xf32>, vector<2x128xf32> -> vector<2x128xf32>
    %c0_14 = arith.constant 0 : index
    %c0_15 = arith.constant 0 : index
    %37 = vector.load %arg5[%c0_14, %c0_15] : memref<1x128xf32, #tpu.memory_space<vmem>>, vector<1x128xf32>
    %38 = vector.broadcast %37 : vector<1x128xf32> to vector<2x128xf32>
    %39 = arith.addf %36, %38 : vector<2x128xf32>
    %c0_16 = arith.constant 0 : index
    %c0_17 = arith.constant 0 : index
    %40 = vector.load %arg6[%c0_16, %c0_17] : memref<2x128xf32, #tpu.memory_space<vmem>>, vector<2x128xf32>
    tpu.vector_store %arg6[%c0_16, %c0_17], %39 {strides = array<i32>} : memref<2x128xf32, #tpu.memory_space<vmem>>, vector<2x128xf32>,
    return
  }
}

</mosaic_0001>

<llo_original>
// kernel: tpu_custom_call.1
$region0: #{tpu_custom_call.1}
  #allocation0 [shape = 'u32[]', space=smem, size = 0x4, offset = 0x4, fixed_abs, tag = 'smem constant byte address 0x4 - core index']
  #allocation1 [shape = 'u32[144,128]{1,0:T(1,128)}', space=vmem, size = 0x12000, scoped, tag = 'internal scratch']
  %s0 = inlined_call_operand.vmem [shape: s32[16,1], index: 0, kind: input, shape index: {}]
  %s1 = inlined_call_operand.vmem [shape: f32[1,16], index: 1, kind: input, shape index: {}]
  %s2 = inlined_call_operand.hbm [shape: bf16[128,128], index: 2, kind: input, shape index: {}]
  %s3 = inlined_call_operand.vmem [shape: f32[2,128], index: 3, kind: input, shape index: {}]
  %s4 = inlined_call_operand.hbm [shape: f32[128,128], index: 4, kind: input, shape index: {}]
  %s5 = inlined_call_operand.vmem [shape: f32[1,128], index: 5, kind: input, shape index: {}]
  %s6 = inlined_call_operand.hbm [shape: f32[2,128], index: 6, kind: output, shape index: {}]
  %s7 = sld [smem:[#allocation0]]
  $region42: #{tpu_custom_call.1} parent=0
    _
  %s9 = ssub.s32 1, %s7
  %s10 = scalar_select 0, %s9, %s7
  $region1: #{tpu_custom_call.1} parent=0
    #allocation2 [shape = 'u8[32768]{0}', space=vmem, size = 0x8000, scoped, tag = 'input window, operand 2, single buffered']
    #allocation3 [shape = 's32[1]{0}', space=sflag, size = 0x4, scoped, tag = 'scoped memory for tpu_custom_call.1']
    #allocation4 [shape = 's32[1]{0}', space=sflag, size = 0x4, scoped, tag = 'scoped memory for tpu_custom_call.1']
    #allocation5 [shape = 'u8[65536]{0}', space=vmem, size = 0x10000, scoped, tag = 'input window, operand 4, single buffered']
    #allocation6 [shape = 's32[1]{0}', space=sflag, size = 0x4, scoped, tag = 'scoped memory for tpu_custom_call.1']
    #allocation7 [shape = 'u8[1024]{0}', space=vmem, size = 0x400, scoped, tag = 'output window, operand 0, single buffered']
    %11 = vsyncpa [#allocation3], 0
    %12 = vsyncpa [#allocation6], 0
    %13 = vsyncpa [#allocation4], 0
    // Predicated region
    $region2: #{tpu_custom_call.1} parent=1 // pred_check
      _
    $region3: #{tpu_custom_call.1} parent=1 // pred_check_branch
      %15 = sbr.rel (0) target = $region5
    $region4: #{tpu_custom_call.1} parent=1 // pred_region
      _
    $region5: #{tpu_custom_call.1} parent=1 // pred_fallthru
      _
    // Predicated region
    $region6: #{tpu_custom_call.1} parent=1 // pred_check
      _
    $region7: #{tpu_custom_call.1} parent=1 // pred_check_branch
      %17 = sbr.rel (0) target = $region9
    $region8: #{tpu_custom_call.1} parent=1 // pred_region
      _
    $region9: #{tpu_custom_call.1} parent=1 // pred_fallthru
      _
    // Predicated region
    $region10: #{tpu_custom_call.1} parent=1 // pred_check
      _
    $region11: #{tpu_custom_call.1} parent=1 // pred_check_branch
      %19 = sbr.rel (0) target = $region13
    $region12: #{tpu_custom_call.1} parent=1 // pred_region
      %s21 = ssub.s32 1024, 1024
      %22 = vsyncadd [#allocation3], %s21
      %s23 = sshll.u32 [#allocation2], 4
      %s24 = int_to_ptr.vmem [resolvable:$true] %s23
      %29 = dma.hbm_to_vmem [thread:$0]  %s2, 1024, %s24, [#allocation3], 64, 64, 4
    $region13: #{tpu_custom_call.1} parent=1 // pred_fallthru
      _
    // Predicated region
    $region14: #{tpu_custom_call.1} parent=1 // pred_check
      _
    $region15: #{tpu_custom_call.1} parent=1 // pred_check_branch
      %31 = sbr.rel (0) target = $region17
    $region16: #{tpu_custom_call.1} parent=1 // pred_region
      _
    $region17: #{tpu_custom_call.1} parent=1 // pred_fallthru
      _
    // Predicated region
    $region18: #{tpu_custom_call.1} parent=1 // pred_check
      _
    $region19: #{tpu_custom_call.1} parent=1 // pred_check_branch
      %33 = sbr.rel (0) target = $region21
    $region20: #{tpu_custom_call.1} parent=1 // pred_region
      %s35 = ssub.s32 2048, 2048
      %36 = vsyncadd [#allocation6], %s35
      %s37 = sshll.u32 [#allocation5], 4
      %s38 = int_to_ptr.vmem [resolvable:$true] %s37
      %43 = dma.hbm_to_vmem [thread:$0]  %s4, 2048, %s38, [#allocation6], 128, 128, 8
    $region21: #{tpu_custom_call.1} parent=1 // pred_fallthru
      _
    // Predicated region
    $region22: #{tpu_custom_call.1} parent=1 // pred_check
      _
    $region23: #{tpu_custom_call.1} parent=1 // pred_check_branch
      %45 = sbr.rel (0) target = $region25
    $region24: #{tpu_custom_call.1} parent=1 // pred_region
      _
    $region25: #{tpu_custom_call.1} parent=1 // pred_fallthru
      _
    // Predicated region
    $region26: #{tpu_custom_call.1} parent=1 // pred_check
      _
    $region27: #{tpu_custom_call.1} parent=1 // pred_check_branch
      %47 = sbr.rel (0) target = $region29
    $region28: #{tpu_custom_call.1} parent=1 // pred_region
      %48 = dma.done [#allocation3], 1024
    $region29: #{tpu_custom_call.1} parent=1 // pred_fallthru
      _
    // Predicated region
    $region30: #{tpu_custom_call.1} parent=1 // pred_check
      _
    $region31: #{tpu_custom_call.1} parent=1 // pred_check_branch
      %50 = sbr.rel (0) target = $region33
    $region32: #{tpu_custom_call.1} parent=1 // pred_region
      %51 = dma.done [#allocation6], 2048
    $region33: #{tpu_custom_call.1} parent=1 // pred_fallthru
      _
    %v53 = vlaneseq
    %v54 = vand.u32 %v53, 127
    %v55 = vld [vmem:[%s0] sm:$0xff]
    %v56 = vld [vmem:[%s0 + $0x8] sm:$0xff]
    %57 = vset.pattern.permute.xlu0 0
    %58 = vperm.xlu0 %57, %v55
    %v59 = vpop.permute.xlu0 %58
    %60 = vset.pattern.permute.xlu0 0
    %61 = vperm.xlu0 %60, %v56
    %v62 = vpop.permute.xlu0 %61
    %vm63 = vcmp.eq.s32.totalorder %v59, %v54
    %vm64 = vcmp.eq.s32.totalorder %v62, %v54
    %v65 = vsel %vm63, 1, 0
    %v66 = vsel %vm64, 1, 0
    %v67 = vcvt.s32.f32 %v65
    %v68 = vcvt.s32.f32 %v66
    %v69 = vpack.c.bf16 %v68, %v67
    %v70 = vlaneseq
    %v71 = vshrl.u32 %v70, 7
    %v72 = vmul.u32 %v71, 8
    %vm73 = vcmp.ge.s32.totalorder %v54, %v72
    %v74 = vadd.s32 %v72, 8
    %vm75 = vcmp.lt.s32.totalorder %v54, %v74
    %vm76 = vmand %vm73, %vm75
    %v77 = vsel %vm76, 1, 0
    %v78 = vcvt.s32.f32 %v77
    %v79 = vld [vmem:[%s1] sm:$0x1]
    %v81 = vlaneseq
    %v82 = vshrl.u32 %v81, 7
    %v83 = vsub.s32 0, %v82
    %v84 = vrot.slane %v79, %v83
    %v86 = vmul.f32 %v78, %v84
    %vm87 = vcmask 123904
    %v88 = vsel %vm87, %v86, 0.0
    %89 = vadd.xlane.f32.xlu0 %v88
    %v90 = vpop.xlane.xlu0 %89
    %v91 = vpack.c.bf16 %v86, %v86
    %vm92 = vcmask 130048
    %v94 = vsel %vm92, %v91, 0
    %96 = vmatprep.subr.bf16.mxu0 0
    %97 = vmatpush1.bf16.msra.mxu0 0
    %98 = vmatprep.subr.bf16.mxu0 0
    %99 = vmatpush1.bf16.msra.mxu0 0
    %100 = vmatprep.subr.bf16.mxu0 0
    %101 = vmatpush1.bf16.msra.mxu0 0
    %102 = vmatprep.subr.bf16.mxu0 0
    %103 = vmatpush1.bf16.msra.mxu0 0
    %104 = vmatprep.subr.bf16.mxu0 0
    %105 = vmatpush1.bf16.msra.mxu0 0
    %106 = vmatprep.subr.bf16.mxu0 0
    %107 = vmatpush1.bf16.msra.mxu0 0
    %108 = vmatprep.subr.bf16.mxu0 0
    %109 = vmatpush1.bf16.msra.mxu0 0
    %110 = vmatprep.subr.bf16.mxu0 0
    %111 = vmatpush1.bf16.msra.mxu0 %v69
    %112 = vmatprep.subr.bf16.mxu0 0
    %113 = vmatpush2.bf16.msra.mxu0 0
    %114 = vmatprep.subr.bf16.mxu0 0
    %115 = vmatpush2.bf16.msra.mxu0 0
    %116 = vmatprep.subr.bf16.mxu0 0
    %117 = vmatpush2.bf16.msra.mxu0 0
    %118 = vmatprep.subr.bf16.mxu0 0
    %119 = vmatpush2.bf16.msra.mxu0 0
    %120 = vmatprep.subr.bf16.mxu0 0
    %121 = vmatpush2.bf16.msra.mxu0 0
    %122 = vmatprep.subr.bf16.mxu0 0
    %123 = vmatpush2.bf16.msra.mxu0 0
    %124 = vmatprep.subr.bf16.mxu0 0
    %125 = vmatpush2.bf16.msra.mxu0 0
    %126 = vmatprep.subr.bf16.mxu0 0
    %127 = vmatpush2.bf16.msra.mxu0 0
    %128 = vmatprep.mubr.bf16.mxu0 0
    %129 = vmatmul.mubr.bf16.gmra.mxu0 %v94
    %v130 = vpop.f32.mrf.mxu0
    %v131 = vadd.f32 0.0, %v130
    %v132 = vpop.f32.mrf.mxu0
    %v133 = vpop.f32.mrf.mxu0
    %v134 = vpop.f32.mrf.mxu0
    %135 = vdwg.mxu0
    %v136 = vpack.c.bf16 %v131, %v131
    %v137 = vld [vmem:[#allocation2] sm:$0xf]
    %v138 = vld [vmem:[#allocation2 + $0x4] sm:$0xf]
    %v139 = vld [vmem:[#allocation2 + $0x8] sm:$0xf]
    %v140 = vld [vmem:[#allocation2 + $0xc] sm:$0xf]
    %v141 = vld [vmem:[#allocation2 + $0x10] sm:$0xf]
    %v142 = vld [vmem:[#allocation2 + $0x14] sm:$0xf]
    %v143 = vld [vmem:[#allocation2 + $0x18] sm:$0xf]
    %v144 = vld [vmem:[#allocation2 + $0x1c] sm:$0xf]
    %v145 = vld [vmem:[#allocation2 + $0x20] sm:$0xf]
    %v146 = vld [vmem:[#allocation2 + $0x24] sm:$0xf]
    %v147 = vld [vmem:[#allocation2 + $0x28] sm:$0xf]
    %v148 = vld [vmem:[#allocation2 + $0x2c] sm:$0xf]
    %v149 = vld [vmem:[#allocation2 + $0x30] sm:$0xf]
    %v150 = vld [vmem:[#allocation2 + $0x34] sm:$0xf]
    %v151 = vld [vmem:[#allocation2 + $0x38] sm:$0xf]
    %v152 = vld [vmem:[#allocation2 + $0x3c] sm:$0xf]
    %v169 = vunpack.c.l.b16 %v137
    %v170 = vunpack.c.l.b16 %v138
    %v171 = vunpack.c.l.b16 %v139
    %v172 = vunpack.c.l.b16 %v140
    %v173 = vunpack.c.l.b16 %v141
    %v174 = vunpack.c.l.b16 %v142
    %v175 = vunpack.c.l.b16 %v143
    %v176 = vunpack.c.l.b16 %v144
    %v177 = vunpack.c.l.b16 %v145
    %v178 = vunpack.c.l.b16 %v146
    %v179 = vunpack.c.l.b16 %v147
    %v180 = vunpack.c.l.b16 %v148
    %v181 = vunpack.c.l.b16 %v149
    %v182 = vunpack.c.l.b16 %v150
    %v183 = vunpack.c.l.b16 %v151
    %v184 = vunpack.c.l.b16 %v152
    %v185 = vpack.c.b16 %v170, %v169
    %v186 = vpack.c.b16 %v172, %v171
    %v187 = vpack.c.b16 %v174, %v173
    %v188 = vpack.c.b16 %v176, %v175
    %v189 = vpack.c.b16 %v178, %v177
    %v190 = vpack.c.b16 %v180, %v179
    %v191 = vpack.c.b16 %v182, %v181
    %v192 = vpack.c.b16 %v184, %v183
    %201 = vmatprep.subr.bf16.mxu0 0
    %202 = vmatpush1.bf16.msra.mxu0 %v192
    %203 = vmatprep.subr.bf16.mxu0 0
    %204 = vmatpush1.bf16.msra.mxu0 %v191
    %205 = vmatprep.subr.bf16.mxu0 0
    %206 = vmatpush1.bf16.msra.mxu0 %v190
    %207 = vmatprep.subr.bf16.mxu0 0
    %208 = vmatpush1.bf16.msra.mxu0 %v189
    %209 = vmatprep.subr.bf16.mxu0 0
    %210 = vmatpush1.bf16.msra.mxu0 %v188
    %211 = vmatprep.subr.bf16.mxu0 0
    %212 = vmatpush1.bf16.msra.mxu0 %v187
    %213 = vmatprep.subr.bf16.mxu0 0
    %214 = vmatpush1.bf16.msra.mxu0 %v186
    %215 = vmatprep.subr.bf16.mxu0 0
    %216 = vmatpush1.bf16.msra.mxu0 %v185
    %217 = vmatprep.subr.bf16.mxu0 0
    %218 = vmatpush2.bf16.msra.mxu0 0
    %219 = vmatprep.subr.bf16.mxu0 0
    %220 = vmatpush2.bf16.msra.mxu0 0
    %221 = vmatprep.subr.bf16.mxu0 0
    %222 = vmatpush2.bf16.msra.mxu0 0
    %223 = vmatprep.subr.bf16.mxu0 0
    %224 = vmatpush2.bf16.msra.mxu0 0
    %225 = vmatprep.subr.bf16.mxu0 0
    %226 = vmatpush2.bf16.msra.mxu0 0
    %227 = vmatprep.subr.bf16.mxu0 0
    %228 = vmatpush2.bf16.msra.mxu0 0
    %229 = vmatprep.subr.bf16.mxu0 0
    %230 = vmatpush2.bf16.msra.mxu0 0
    %231 = vmatprep.subr.bf16.mxu0 0
    %232 = vmatpush2.bf16.msra.mxu0 0
    %233 = vmatprep.mubr.bf16.mxu0 0
    %234 = vmatmul.mubr.bf16.gmra.mxu0 %v136
    %v235 = vpop.f32.mrf.mxu0
    %v236 = vadd.f32 0.0, %v235
    %v237 = vpop.f32.mrf.mxu0
    %v238 = vpop.f32.mrf.mxu0
    %v239 = vpop.f32.mrf.mxu0
    %240 = vdwg.mxu0
    %v241 = vmax.f32 %v90, 1.0
    %v242 = vrcp.pop %v241
    %v243 = vmul.f32 %v236, %v242
    %v244 = vld [vmem:[%s3] sm:$0x3]
    %v245 = vmul.f32 %v243, %v244
    %v246 = vld [vmem:[#allocation5] sm:$0xff]
    %v247 = vld [vmem:[#allocation5 + $0x8] sm:$0xff]
    %v248 = vld [vmem:[#allocation5 + $0x10] sm:$0xff]
    %v249 = vld [vmem:[#allocation5 + $0x18] sm:$0xff]
    %v250 = vld [vmem:[#allocation5 + $0x20] sm:$0xff]
    %v251 = vld [vmem:[#allocation5 + $0x28] sm:$0xff]
    %v252 = vld [vmem:[#allocation5 + $0x30] sm:$0xff]
    %v253 = vld [vmem:[#allocation5 + $0x38] sm:$0xff]
    %v254 = vld [vmem:[#allocation5 + $0x40] sm:$0xff]
    %v255 = vld [vmem:[#allocation5 + $0x48] sm:$0xff]
    %v256 = vld [vmem:[#allocation5 + $0x50] sm:$0xff]
    %v257 = vld [vmem:[#allocation5 + $0x58] sm:$0xff]
    %v258 = vld [vmem:[#allocation5 + $0x60] sm:$0xff]
    %v259 = vld [vmem:[#allocation5 + $0x68] sm:$0xff]
    %v260 = vld [vmem:[#allocation5 + $0x70] sm:$0xff]
    %v261 = vld [vmem:[#allocation5 + $0x78] sm:$0xff]
    %v262 = vld [vmem:[%s5] sm:$0x1]
    %v264 = vlaneseq
    %v265 = vshrl.u32 %v264, 7
    %v266 = vsub.s32 0, %v265
    %v267 = vrot.slane %v262, %v266
    %269 = vmatprep.subr.mxu0 0.0
    %270 = vmatpush1.msra.mxu0 %v261
    %271 = vmatprep.subr.mxu0 0.0
    %272 = vmatpush1.msra.mxu0 %v260
    %273 = vmatprep.subr.mxu0 0.0
    %274 = vmatpush1.msra.mxu0 %v259
    %275 = vmatprep.subr.mxu0 0.0
    %276 = vmatpush1.msra.mxu0 %v258
    %277 = vmatprep.subr.mxu0 0.0
    %278 = vmatpush1.msra.mxu0 %v257
    %279 = vmatprep.subr.mxu0 0.0
    %280 = vmatpush1.msra.mxu0 %v256
    %281 = vmatprep.subr.mxu0 0.0
    %282 = vmatpush1.msra.mxu0 %v255
    %283 = vmatprep.subr.mxu0 0.0
    %284 = vmatpush1.msra.mxu0 %v254
    %285 = vmatprep.subr.mxu0 0.0
    %286 = vmatpush1.msra.mxu0 %v253
    %287 = vmatprep.subr.mxu0 0.0
    %288 = vmatpush1.msra.mxu0 %v252
    %289 = vmatprep.subr.mxu0 0.0
    %290 = vmatpush1.msra.mxu0 %v251
    %291 = vmatprep.subr.mxu0 0.0
    %292 = vmatpush1.msra.mxu0 %v250
    %293 = vmatprep.subr.mxu0 0.0
    %294 = vmatpush1.msra.mxu0 %v249
    %295 = vmatprep.subr.mxu0 0.0
    %296 = vmatpush1.msra.mxu0 %v248
    %297 = vmatprep.subr.mxu0 0.0
    %298 = vmatpush1.msra.mxu0 %v247
    %299 = vmatprep.subr.mxu0 0.0
    %300 = vmatpush1.msra.mxu0 %v246
    %301 = vmatprep.subr.mxu0 0.0
    %302 = vmatpush2.msra.mxu0 0.0
    %303 = vmatprep.subr.mxu0 0.0
    %304 = vmatpush2.msra.mxu0 0.0
    %305 = vmatprep.subr.mxu0 0.0
    %306 = vmatpush2.msra.mxu0 0.0
    %307 = vmatprep.subr.mxu0 0.0
    %308 = vmatpush2.msra.mxu0 0.0
    %309 = vmatprep.subr.mxu0 0.0
    %310 = vmatpush2.msra.mxu0 0.0
    %311 = vmatprep.subr.mxu0 0.0
    %312 = vmatpush2.msra.mxu0 0.0
    %313 = vmatprep.subr.mxu0 0.0
    %314 = vmatpush2.msra.mxu0 0.0
    %315 = vmatprep.subr.mxu0 0.0
    %316 = vmatpush2.msra.mxu0 0.0
    %317 = vmatprep.subr.mxu0 0.0
    %318 = vmatpush2.msra.mxu0 0.0
    %319 = vmatprep.subr.mxu0 0.0
    %320 = vmatpush2.msra.mxu0 0.0
    %321 = vmatprep.subr.mxu0 0.0
    %322 = vmatpush2.msra.mxu0 0.0
    %323 = vmatprep.subr.mxu0 0.0
    %324 = vmatpush2.msra.mxu0 0.0
    %325 = vmatprep.subr.mxu0 0.0
    %326 = vmatpush2.msra.mxu0 0.0
    %327 = vmatprep.subr.mxu0 0.0
    %328 = vmatpush2.msra.mxu0 0.0
    %329 = vmatprep.subr.mxu0 0.0
    %330 = vmatpush2.msra.mxu0 0.0
    %331 = vmatprep.subr.mxu0 0.0
    %332 = vmatpush2.msra.mxu0 0.0
    %333 = vmatprep.mubr.f32.mxu0 0.0
    %334 = vmatmul.mubr.f32.gmra.mxu0 %v245
    %v335 = vpop.f32.mrf.mxu0
    %v336 = vadd.f32 %v267, %v335
    %v337 = vpop.f32.mrf.mxu0
    %338 = vdwg.mxu0
    %339 = vst [vmem:[#allocation7] sm:$0x3] %v336
    // Predicated region
    $region34: #{tpu_custom_call.1} parent=1 // pred_check
      _
    $region35: #{tpu_custom_call.1} parent=1 // pred_check_branch
      %341 = sbr.rel (0) target = $region37
    $region36: #{tpu_custom_call.1} parent=1 // pred_region
      %s343 = ssub.s32 32, 32
      %344 = vsyncadd [#allocation4], %s343
      %s346 = sshll.u32 [#allocation7], 4
      %s347 = int_to_ptr.vmem [resolvable:$true] %s346
      %349 = dma.vmem_to_hbm [thread:$0]  %s347, 32, %s6, [#allocation4]
    $region37: #{tpu_custom_call.1} parent=1 // pred_fallthru
      _
    // Predicated region
    $region38: #{tpu_custom_call.1} parent=1 // pred_check
      _
    $region39: #{tpu_custom_call.1} parent=1 // pred_check_branch
      %351 = sbr.rel (0) target = $region41
    $region40: #{tpu_custom_call.1} parent=1 // pred_region
      %352 = dma.done [#allocation4], 32
    $region41: #{tpu_custom_call.1} parent=1 // pred_fallthru
      _
    %353 = vsyncpa [#allocation3], 1
    %354 = vsyncpa [#allocation6], 1
    %355 = vsyncpa [#allocation4], 1

</llo_original>
